<compile_context>
chip_gen: v7x
topology: tpu7x:2x2x1
jax: 0.10.0
libtpu: 0.0.40
codegen_flags: <defaults>
</compile_context>

<pallas_src>
import functools

import jax
import jax.numpy as jnp
from jax.experimental import pallas as pl
from jax.experimental.pallas import tpu as pltpu

TAU = 0.5
NORM = True


def _infonce_kernel(anchor_ref, pos_stream_ref, pos_diag_ref,   # inputs
                    loss_ref,                                   # output (TI, 1)
                    a_scaled_ref, rowsum_ref, sdiag_ref,        # VMEM scratch
                    *, tau, norm):
    j = pl.program_id(1)
    nj = pl.num_programs(1)

    inv_tau = jnp.float32(1.0 / tau)

    @pl.when(j == 0)
    def _init():
        # Normalize + temperature-scale the anchor row block once; reuse for
        # every streamed column block.
        a = anchor_ref[...].astype(jnp.float32)                  # [TI, D]
        if norm:
            inv_a = jax.lax.rsqrt(jnp.sum(a * a, axis=1, keepdims=True))
            a_scaled = a * (inv_a * inv_tau)
        else:
            a_scaled = a * inv_tau
        a_scaled_ref[...] = a_scaled
        rowsum_ref[...] = jnp.zeros_like(rowsum_ref)

        # Positive-pair (diagonal) score: row-wise dot with matching rows.
        pd = pos_diag_ref[...].astype(jnp.float32)               # [TI, D]
        if norm:
            inv_pd = jax.lax.rsqrt(jnp.sum(pd * pd, axis=1, keepdims=True))
            pd = pd * inv_pd
        sdiag_ref[...] = jnp.sum(a_scaled * pd, axis=1, keepdims=True)

    # Stream one column block of positives: normalize, matmul, exp, reduce.
    p = pos_stream_ref[...].astype(jnp.float32)                  # [TJ, D]
    if norm:
        inv_p = jax.lax.rsqrt(jnp.sum(p * p, axis=1, keepdims=True))
        p = p * inv_p

    # sim[i, j] = <a_scaled_i, p_j>   ('ik,jk->ij') on the MXU.
    sim = jax.lax.dot_general(
        a_scaled_ref[...], p,
        dimension_numbers=(((1,), (1,)), ((), ())),
        preferred_element_type=jnp.float32,
    )                                                            # [TI, TJ]

    # exp (EUP) + in-register/VMEM row reduction; the tile is never stored out.
    rowsum_ref[...] += jnp.sum(jnp.exp(sim), axis=1, keepdims=True)

    @pl.when(j == nj - 1)
    def _finalize():
        s_diag = sdiag_ref[...]                                  # [TI, 1]
        pos_sim = jnp.exp(s_diag)
        # -log(pos / (sum - pos)) == log(sum - pos) - s_diag
        loss_ref[...] = jnp.log(rowsum_ref[...] - pos_sim) - s_diag


def _pick_tile(b, cap):
    """Largest tile <= cap that divides b and is a multiple of 8 (or b itself)."""
    if b <= cap:
        return b
    t = (cap // 8) * 8
    while t >= 8:
        if b % t == 0:
            return t
        t -= 8
    return b


def infonce_loss(embed_anchor, embed_positive, tau=TAU, norm=NORM):
    B, D = embed_anchor.shape
    TI = _pick_tile(B, 128)   # anchor row block
    TJ = _pick_tile(B, 512)   # streamed positive column block
    grid = (B // TI, B // TJ)

    per_sample = pl.pallas_call(
        functools.partial(_infonce_kernel, tau=tau, norm=norm),
        out_shape=jax.ShapeDtypeStruct((B, 1), jnp.float32),
        grid_spec=pltpu.PrefetchScalarGridSpec(
            num_scalar_prefetch=0,
            grid=grid,
            in_specs=[
                pl.BlockSpec((TI, D), lambda i, j: (i, 0)),   # anchor rows
                pl.BlockSpec((TJ, D), lambda i, j: (j, 0)),   # positives (stream)
                pl.BlockSpec((TI, D), lambda i, j: (i, 0)),   # positives (diag rows)
            ],
            out_specs=pl.BlockSpec((TI, 1), lambda i, j: (i, 0)),
            scratch_shapes=[
                pltpu.VMEM((TI, D), jnp.float32),   # scaled anchors (reused over j)
                pltpu.VMEM((TI, 1), jnp.float32),   # running row-sum of exp(sim)
                pltpu.VMEM((TI, 1), jnp.float32),   # diagonal scores
            ],
        ),
        compiler_params=pltpu.CompilerParams(
            dimension_semantics=("parallel", "arbitrary")),
    )(embed_anchor, embed_positive, embed_positive)

    return jnp.sum(per_sample) / B


def infonce_ref(a, p, tau=TAU, norm=NORM):
    a = a.astype(jnp.float32)
    p = p.astype(jnp.float32)
    sim = jnp.einsum("ik,jk->ij", a, p)
    if norm:
        an = jnp.linalg.norm(a, axis=1)
        pn = jnp.linalg.norm(p, axis=1)
        sim = sim / jnp.einsum("i,j->ij", an, pn)
    sim = jnp.exp(sim / tau)
    pos = jnp.diag(sim)
    loss = pos / (jnp.sum(sim, axis=1) - pos)
    return -jnp.mean(jnp.log(loss))


if __name__ == "__main__":
    key = jax.random.PRNGKey(0)
    k1, k2, k3, k4 = jax.random.split(key, 4)

    # Small shape implied by the module's forward: [batch, embed_dim].
    B, D = 8, 32
    embed_anchor = jax.random.normal(k1, (B, D), dtype=jnp.float32)
    embed_positive = jax.random.normal(k2, (B, D), dtype=jnp.float32)

    loss = infonce_loss(embed_anchor, embed_positive)
    jax.block_until_ready(loss)
    ref = infonce_ref(embed_anchor, embed_positive)
    assert jnp.allclose(loss, ref, rtol=1e-5, atol=1e-5), (loss, ref)

    # Secondary check exercising the tiled/streamed path (grid > (1, 1)).
    B2, D2 = 640, 128
    a2 = jax.random.normal(k3, (B2, D2), dtype=jnp.float32)
    p2 = jax.random.normal(k4, (B2, D2), dtype=jnp.float32)
    loss2 = infonce_loss(a2, p2)
    jax.block_until_ready(loss2)
    ref2 = infonce_ref(a2, p2)
    assert jnp.allclose(loss2, ref2, rtol=1e-5, atol=1e-5), (loss2, ref2)

    print("KERNEL_OK")
</pallas_src>

<mosaic_0001>
module attributes {stable_mosaic.version = 11 : i64} {
  func.func @_infonce_kernel(%arg0: i32, %arg1: i32, %arg2: memref<8x32xf32, #tpu.memory_space<vmem>>, %arg3: memref<8x32xf32, #tpu.memory_space<vmem>>, %arg4: memref<8x32xf32, #tpu.memory_space<vmem>>, %arg5: memref<8x1xf32, #tpu.memory_space<vmem>>, %arg6: memref<8x32xf32, #tpu.memory_space<vmem>>, %arg7: memref<8x1xf32, #tpu.memory_space<vmem>>, %arg8: memref<8x1xf32, #tpu.memory_space<vmem>>) attributes {dimension_semantics = [#tpu.dimension_semantics<parallel>, #tpu.dimension_semantics<arbitrary>], iteration_bounds = array<i64: 1, 1>, scalar_prefetch = 0 : i64, scratch_operands = 3 : i64, tpu.core_type = #tpu.core_type<tc>, window_params = [{transform_indices = @transform_0, window_bounds = array<i64: 8, 32>}, {transform_indices = @transform_1, window_bounds = array<i64: 8, 32>}, {transform_indices = @transform_2, window_bounds = array<i64: 8, 32>}, {transform_indices = @transform_3, window_bounds = array<i64: 8, 1>}]} {
    %c0_i32 = arith.constant 0 : i32
    %0 = arith.cmpi eq, %arg1, %c0_i32 : i32
    %1 = arith.extui %0 : i1 to i32
    %cst = arith.constant 2.000000e+00 : f32
    %c0_i32_0 = arith.constant 0 : i32
    %2 = arith.cmpi ne, %1, %c0_i32_0 : i32
    scf.if %2 {
      %c0_13 = arith.constant 0 : index
      %c0_14 = arith.constant 0 : index
      %21 = vector.load %arg2[%c0_13, %c0_14] : memref<8x32xf32, #tpu.memory_space<vmem>>, vector<8x32xf32>
      %22 = arith.mulf %21, %21 : vector<8x32xf32>
      %cst_15 = arith.constant dense<0.000000e+00> : vector<8xf32>
      %23 = vector.multi_reduction <add>, %22, %cst_15 [1] : vector<8x32xf32> to vector<8xf32>
      %24 = vector.shape_cast %23 : vector<8xf32> to vector<8x1xf32>
      %25 = math.rsqrt %24 : vector<8x1xf32>
      %26 = vector.broadcast %cst : f32 to vector<8x1xf32>
      %27 = arith.mulf %25, %26 : vector<8x1xf32>
      %28 = vector.broadcast %27 : vector<8x1xf32> to vector<8x32xf32>
      %29 = arith.mulf %21, %28 : vector<8x32xf32>
      %c0_16 = arith.constant 0 : index
      %c0_17 = arith.constant 0 : index
      %30 = vector.load %arg6[%c0_16, %c0_17] : memref<8x32xf32, #tpu.memory_space<vmem>>, vector<8x32xf32>
      tpu.vector_store %arg6[%c0_16, %c0_17], %29 {strides = array<i32>} : memref<8x32xf32, #tpu.memory_space<vmem>>, vector<8x32xf32>,
      %cst_18 = arith.constant 0.000000e+00 : f32
      %31 = vector.broadcast %cst_18 : f32 to vector<8x1xf32>
      %c0_19 = arith.constant 0 : index
      %c0_20 = arith.constant 0 : index
      %32 = vector.load %arg7[%c0_19, %c0_20] : memref<8x1xf32, #tpu.memory_space<vmem>>, vector<8x1xf32>
      tpu.vector_store %arg7[%c0_19, %c0_20], %31 {strides = array<i32>} : memref<8x1xf32, #tpu.memory_space<vmem>>, vector<8x1xf32>,
      %c0_21 = arith.constant 0 : index
      %c0_22 = arith.constant 0 : index
      %33 = vector.load %arg4[%c0_21, %c0_22] : memref<8x32xf32, #tpu.memory_space<vmem>>, vector<8x32xf32>
      %34 = arith.mulf %33, %33 : vector<8x32xf32>
      %cst_23 = arith.constant dense<0.000000e+00> : vector<8xf32>
      %35 = vector.multi_reduction <add>, %34, %cst_23 [1] : vector<8x32xf32> to vector<8xf32>
      %36 = vector.shape_cast %35 : vector<8xf32> to vector<8x1xf32>
      %37 = math.rsqrt %36 : vector<8x1xf32>
      %38 = vector.broadcast %37 : vector<8x1xf32> to vector<8x32xf32>
      %39 = arith.mulf %33, %38 : vector<8x32xf32>
      %40 = arith.mulf %29, %39 : vector<8x32xf32>
      %cst_24 = arith.constant dense<0.000000e+00> : vector<8xf32>
      %41 = vector.multi_reduction <add>, %40, %cst_24 [1] : vector<8x32xf32> to vector<8xf32>
      %42 = vector.shape_cast %41 : vector<8xf32> to vector<8x1xf32>
      %c0_25 = arith.constant 0 : index
      %c0_26 = arith.constant 0 : index
      %43 = vector.load %arg8[%c0_25, %c0_26] : memref<8x1xf32, #tpu.memory_space<vmem>>, vector<8x1xf32>
      tpu.vector_store %arg8[%c0_25, %c0_26], %42 {strides = array<i32>} : memref<8x1xf32, #tpu.memory_space<vmem>>, vector<8x1xf32>,
    } else {
    }
    %c0 = arith.constant 0 : index
    %c0_1 = arith.constant 0 : index
    %3 = vector.load %arg3[%c0, %c0_1] : memref<8x32xf32, #tpu.memory_space<vmem>>, vector<8x32xf32>
    %4 = arith.mulf %3, %3 : vector<8x32xf32>
    %cst_2 = arith.constant dense<0.000000e+00> : vector<8xf32>
    %5 = vector.multi_reduction <add>, %4, %cst_2 [1] : vector<8x32xf32> to vector<8xf32>
    %6 = vector.shape_cast %5 : vector<8xf32> to vector<8x1xf32>
    %7 = math.rsqrt %6 : vector<8x1xf32>
    %8 = vector.broadcast %7 : vector<8x1xf32> to vector<8x32xf32>
    %9 = arith.mulf %3, %8 : vector<8x32xf32>
    %c0_3 = arith.constant 0 : index
    %c0_4 = arith.constant 0 : index
    %10 = vector.load %arg6[%c0_3, %c0_4] : memref<8x32xf32, #tpu.memory_space<vmem>>, vector<8x32xf32>
    %cst_5 = arith.constant dense<0.000000e+00> : vector<8x8xf32>
    %11 = tpu.matmul %10, %9, %cst_5 {dimension_numbers = #tpu.dot_dimension_numbers<[1], [1], [0], [0], [0, 0, 1, 0], [], []>} : vector<8x32xf32>, vector<8x32xf32>, vector<8x8xf32> -> vector<8x8xf32>
    %c0_6 = arith.constant 0 : index
    %c0_7 = arith.constant 0 : index
    %12 = vector.load %arg7[%c0_6, %c0_7] : memref<8x1xf32, #tpu.memory_space<vmem>>, vector<8x1xf32>
    %13 = math.exp %11 : vector<8x8xf32>
    %cst_8 = arith.constant dense<0.000000e+00> : vector<8xf32>
    %14 = vector.multi_reduction <add>, %13, %cst_8 [1] : vector<8x8xf32> to vector<8xf32>
    %15 = vector.shape_cast %14 : vector<8xf32> to vector<8x1xf32>
    %16 = arith.addf %12, %15 : vector<8x1xf32>
    %c0_9 = arith.constant 0 : index
    %c0_10 = arith.constant 0 : index
    %17 = vector.load %arg7[%c0_9, %c0_10] : memref<8x1xf32, #tpu.memory_space<vmem>>, vector<8x1xf32>
    tpu.vector_store %arg7[%c0_9, %c0_10], %16 {strides = array<i32>} : memref<8x1xf32, #tpu.memory_space<vmem>>, vector<8x1xf32>,
    %c0_i32_11 = arith.constant 0 : i32
    %18 = arith.cmpi eq, %arg1, %c0_i32_11 : i32
    %19 = arith.extui %18 : i1 to i32
    %c0_i32_12 = arith.constant 0 : i32
    %20 = arith.cmpi ne, %19, %c0_i32_12 : i32
    scf.if %20 {
      %c0_13 = arith.constant 0 : index
      %c0_14 = arith.constant 0 : index
      %21 = vector.load %arg8[%c0_13, %c0_14] : memref<8x1xf32, #tpu.memory_space<vmem>>, vector<8x1xf32>
      %22 = math.exp %21 : vector<8x1xf32>
      %c0_15 = arith.constant 0 : index
      %c0_16 = arith.constant 0 : index
      %23 = vector.load %arg7[%c0_15, %c0_16] : memref<8x1xf32, #tpu.memory_space<vmem>>, vector<8x1xf32>
      %24 = arith.subf %23, %22 : vector<8x1xf32>
      %25 = math.log %24 : vector<8x1xf32>
      %26 = arith.subf %25, %21 : vector<8x1xf32>
      %c0_17 = arith.constant 0 : index
      %c0_18 = arith.constant 0 : index
      %27 = vector.load %arg5[%c0_17, %c0_18] : memref<8x1xf32, #tpu.memory_space<vmem>>, vector<8x1xf32>
      tpu.vector_store %arg5[%c0_17, %c0_18], %26 {strides = array<i32>} : memref<8x1xf32, #tpu.memory_space<vmem>>, vector<8x1xf32>,
    } else {
    }
    return
  }
  func.func @transform_0(%arg0: i32, %arg1: i32) -> (i32, i32) {
    %c0_i32 = arith.constant 0 : i32
    %c0_i32_0 = arith.constant 0 : i32
    return %arg0, %c0_i32 : i32, i32
  }
  func.func @transform_1(%arg0: i32, %arg1: i32) -> (i32, i32) {
    %c0_i32 = arith.constant 0 : i32
    %c0_i32_0 = arith.constant 0 : i32
    return %arg1, %c0_i32 : i32, i32
  }
  func.func @transform_2(%arg0: i32, %arg1: i32) -> (i32, i32) {
    %c0_i32 = arith.constant 0 : i32
    %c0_i32_0 = arith.constant 0 : i32
    return %arg0, %c0_i32 : i32, i32
  }
  func.func @transform_3(%arg0: i32, %arg1: i32) -> (i32, i32) {
    %c0_i32 = arith.constant 0 : i32
    %c0_i32_0 = arith.constant 0 : i32
    return %arg0, %c0_i32 : i32, i32
  }
}

</mosaic_0001>

<llo_original>
// kernel: tpu_custom_call.1
$region0: #{tpu_custom_call.1}
  #allocation0 [shape = 'u32[]', space=smem, size = 0x4, offset = 0x4, fixed_abs, tag = 'smem constant byte address 0x4 - core index']
  #allocation1 [shape = 'u32[144,128]{1,0:T(1,128)}', space=vmem, size = 0x12000, scoped, tag = 'internal scratch']
  #allocation2 [shape = 'f32[8,32]{1,0:T(8,128)}', space=vmem, size = 0x1000, scoped, tag = 'scratch operand']
  #allocation3 [shape = 'f32[8,1]{1,0:T(8,128)}', space=vmem, size = 0x1000, scoped, tag = 'scratch operand']
  #allocation4 [shape = 'f32[8,1]{1,0:T(8,128)}', space=vmem, size = 0x1000, scoped, tag = 'scratch operand']
  %s0 = inlined_call_operand.hbm [shape: f32[8,32], index: 0, kind: input, shape index: {}]
  %s1 = inlined_call_operand.hbm [shape: f32[8,32], index: 1, kind: input, shape index: {}]
  %s2 = inlined_call_operand.hbm [shape: f32[8,32], index: 2, kind: input, shape index: {}]
  %s3 = inlined_call_operand.vmem [shape: f32[8,1], index: 3, kind: output, shape index: {}]
  %s4 = sld [smem:[#allocation0]]
  $region42: #{tpu_custom_call.1} parent=0
    _
  %s6 = ssub.s32 1, %s4
  %s7 = scalar_select 0, %s6, %s4
  $region1: #{tpu_custom_call.1} parent=0
    #allocation5 [shape = 'u8[4096]{0}', space=vmem, size = 0x1000, scoped, tag = 'input window, operand 0, single buffered']
    #allocation6 [shape = 's32[1]{0}', space=sflag, size = 0x4, scoped, tag = 'scoped memory for tpu_custom_call.1']
    #allocation7 [shape = 'u8[4096]{0}', space=vmem, size = 0x1000, scoped, tag = 'input window, operand 1, single buffered']
    #allocation8 [shape = 's32[1]{0}', space=sflag, size = 0x4, scoped, tag = 'scoped memory for tpu_custom_call.1']
    #allocation9 [shape = 'u8[4096]{0}', space=vmem, size = 0x1000, scoped, tag = 'input window, operand 2, single buffered']
    %8 = vsyncpa [#allocation6], 0
    %9 = vsyncpa [#allocation8], 0
    // Predicated region
    $region2: #{tpu_custom_call.1} parent=1 // pred_check
      _
    $region3: #{tpu_custom_call.1} parent=1 // pred_check_branch
      %11 = sbr.rel (0) target = $region5
    $region4: #{tpu_custom_call.1} parent=1 // pred_region
      %s13 = ssub.s32 128, 128
      %14 = vsyncadd [#allocation6], %s13
      %s16 = sshll.u32 [#allocation5], 4
      %s17 = int_to_ptr.vmem [resolvable:$true] %s16
      %19 = dma.hbm_to_vmem [thread:$0]  %s0, 128, %s17, [#allocation6]
    $region5: #{tpu_custom_call.1} parent=1 // pred_fallthru
      _
    // Predicated region
    $region6: #{tpu_custom_call.1} parent=1 // pred_check
      _
    $region7: #{tpu_custom_call.1} parent=1 // pred_check_branch
      %21 = sbr.rel (0) target = $region9
    $region8: #{tpu_custom_call.1} parent=1 // pred_region
      %s23 = ssub.s32 128, 128
      %24 = vsyncadd [#allocation8], %s23
      %s26 = sshll.u32 [#allocation7], 4
      %s27 = int_to_ptr.vmem [resolvable:$true] %s26
      %29 = dma.hbm_to_vmem [thread:$0]  %s1, 128, %s27, [#allocation8]
    $region9: #{tpu_custom_call.1} parent=1 // pred_fallthru
      _
    // Predicated region
    $region10: #{tpu_custom_call.1} parent=1 // pred_check
      _
    $region11: #{tpu_custom_call.1} parent=1 // pred_check_branch
      %31 = sbr.rel (0) target = $region13
    $region12: #{tpu_custom_call.1} parent=1 // pred_region
      %s33 = ssub.s32 128, 128
      %34 = vsyncadd [#allocation8], %s33
      %s36 = sshll.u32 [#allocation9], 4
      %s37 = int_to_ptr.vmem [resolvable:$true] %s36
      %39 = dma.hbm_to_vmem [thread:$0]  %s2, 128, %s37, [#allocation8]
    $region13: #{tpu_custom_call.1} parent=1 // pred_fallthru
      _
    // Predicated region
    $region14: #{tpu_custom_call.1} parent=1 // pred_check
      _
    $region15: #{tpu_custom_call.1} parent=1 // pred_check_branch
      %41 = sbr.rel (0) target = $region17
    $region16: #{tpu_custom_call.1} parent=1 // pred_region
      %42 = dma.done [#allocation6], 128
    $region17: #{tpu_custom_call.1} parent=1 // pred_fallthru
      _
    // Predicated region
    $region18: #{tpu_custom_call.1} parent=1 // pred_check
      _
    $region19: #{tpu_custom_call.1} parent=1 // pred_check_branch
      %44 = sbr.rel (0) target = $region21
    $region20: #{tpu_custom_call.1} parent=1 // pred_region
      %45 = dma.done [#allocation8], 128
    $region21: #{tpu_custom_call.1} parent=1 // pred_fallthru
      _
    // Predicated region
    $region22: #{tpu_custom_call.1} parent=1 // pred_check
      _
    $region23: #{tpu_custom_call.1} parent=1 // pred_check_branch
      %47 = sbr.rel (0) target = $region25
    $region24: #{tpu_custom_call.1} parent=1 // pred_region
      %48 = dma.done [#allocation8], 128
    $region25: #{tpu_custom_call.1} parent=1 // pred_fallthru
      _
    %p49 = scmp.eq.s32.totalorder 0, 0
    // Predicated region
    $region26: #{tpu_custom_call.1} parent=1 // pred_check
      %p50 = pneg %p49
    $region27: #{tpu_custom_call.1} parent=1 // pred_check_branch
      %52 = sbr.rel (%p50) target = $region29
    $region28: #{tpu_custom_call.1} parent=1 // pred_region
      %v53 = vld [vmem:[#allocation5] sm:$0xff]
      %v54 = vmul.f32 %v53, %v53
      %vm55 = vcmask 261120
      %v56 = vsel %vm55, %v54, 0.0
      %57 = vadd.xlane.f32.xlu0 %v56
      %v58 = vpop.xlane.xlu0 %57
      %v59 = vrsqrt.pop %v58
      %v60 = vmul.f32 %v59, 2.0
      %v61 = vmul.f32 %v53, %v60
      %62 = vst.msk [vmem:[#allocation2] sm:$0xff] %vm55, %v61
      %vm63 = vcmask 7168
      %64 = vst.msk [vmem:[#allocation3] sm:$0xff] %vm63, 0.0
      %v65 = vld [vmem:[#allocation9] sm:$0xff]
      %v66 = vmul.f32 %v65, %v65
      %v67 = vsel %vm55, %v66, 0.0
      %68 = vadd.xlane.f32.xlu0 %v67
      %v69 = vpop.xlane.xlu0 %68
      %v70 = vrsqrt.pop %v69
      %v71 = vmul.f32 %v65, %v70
      %v72 = vmul.f32 %v61, %v71
      %v73 = vsel %vm55, %v72, 0.0
      %74 = vadd.xlane.f32.xlu0 %v73
      %v75 = vpop.xlane.xlu0 %74
      %76 = vst.msk [vmem:[#allocation4] sm:$0xff] %vm63, %v75
    $region29: #{tpu_custom_call.1} parent=1 // pred_fallthru
      _
    %v77 = vld [vmem:[#allocation7] sm:$0xff]
    %v78 = vmul.f32 %v77, %v77
    %vm79 = vcmask 261120
    %v80 = vsel %vm79, %v78, 0.0
    %81 = vadd.xlane.f32.xlu0 %v80
    %v82 = vpop.xlane.xlu0 %81
    %v83 = vrsqrt.pop %v82
    %v84 = vmul.f32 %v77, %v83
    %v85 = vld [vmem:[#allocation2] sm:$0xff]
    %v87 = vsel %vm79, %v85, 0
    %v90 = vsel %vm79, %v84, 0
    %92 = vmatprep.subr.mxu0 0.0
    %93 = vmatpush1.xpose.msra.mxu0 %v90
    %94 = vmatprep.subr.mxu0 0.0
    %95 = vmatpush1.xpose.msra.mxu0 0.0
    %96 = vmatprep.subr.mxu0 0.0
    %97 = vmatpush1.xpose.msra.mxu0 0.0
    %98 = vmatprep.subr.mxu0 0.0
    %99 = vmatpush1.xpose.msra.mxu0 0.0
    %100 = vmatprep.subr.mxu0 0.0
    %101 = vmatpush1.xpose.msra.mxu0 0.0
    %102 = vmatprep.subr.mxu0 0.0
    %103 = vmatpush1.xpose.msra.mxu0 0.0
    %104 = vmatprep.subr.mxu0 0.0
    %105 = vmatpush1.xpose.msra.mxu0 0.0
    %106 = vmatprep.subr.mxu0 0.0
    %107 = vmatpush1.xpose.msra.mxu0 0.0
    %108 = vmatprep.subr.mxu0 0.0
    %109 = vmatpush1.xpose.msra.mxu0 0.0
    %110 = vmatprep.subr.mxu0 0.0
    %111 = vmatpush1.xpose.msra.mxu0 0.0
    %112 = vmatprep.subr.mxu0 0.0
    %113 = vmatpush1.xpose.msra.mxu0 0.0
    %114 = vmatprep.subr.mxu0 0.0
    %115 = vmatpush1.xpose.msra.mxu0 0.0
    %116 = vmatprep.subr.mxu0 0.0
    %117 = vmatpush1.xpose.msra.mxu0 0.0
    %118 = vmatprep.subr.mxu0 0.0
    %119 = vmatpush1.xpose.msra.mxu0 0.0
    %120 = vmatprep.subr.mxu0 0.0
    %121 = vmatpush1.xpose.msra.mxu0 0.0
    %122 = vmatprep.subr.mxu0 0.0
    %123 = vmatpush1.xpose.msra.mxu0 0.0
    %124 = vmatprep.subr.mxu0 0.0
    %125 = vmatpush1.xpose.msra.mxu0 0.0
    %126 = vmatprep.subr.mxu0 0.0
    %127 = vmatpush1.xpose.msra.mxu0 0.0
    %128 = vmatprep.subr.mxu0 0.0
    %129 = vmatpush1.xpose.msra.mxu0 0.0
    %130 = vmatprep.subr.mxu0 0.0
    %131 = vmatpush1.xpose.msra.mxu0 0.0
    %132 = vmatprep.subr.mxu0 0.0
    %133 = vmatpush1.xpose.msra.mxu0 0.0
    %134 = vmatprep.subr.mxu0 0.0
    %135 = vmatpush1.xpose.msra.mxu0 0.0
    %136 = vmatprep.subr.mxu0 0.0
    %137 = vmatpush1.xpose.msra.mxu0 0.0
    %138 = vmatprep.subr.mxu0 0.0
    %139 = vmatpush1.xpose.msra.mxu0 0.0
    %140 = vmatprep.subr.mxu0 0.0
    %141 = vmatpush1.xpose.msra.mxu0 0.0
    %142 = vmatprep.subr.mxu0 0.0
    %143 = vmatpush1.xpose.msra.mxu0 0.0
    %144 = vmatprep.subr.mxu0 0.0
    %145 = vmatpush1.xpose.msra.mxu0 0.0
    %146 = vmatprep.subr.mxu0 0.0
    %147 = vmatpush1.xpose.msra.mxu0 0.0
    %148 = vmatprep.subr.mxu0 0.0
    %149 = vmatpush1.xpose.msra.mxu0 0.0
    %150 = vmatprep.subr.mxu0 0.0
    %151 = vmatpush1.xpose.msra.mxu0 0.0
    %152 = vmatprep.subr.mxu0 0.0
    %153 = vmatpush1.xpose.msra.mxu0 0.0
    %154 = vmatprep.subr.mxu0 0.0
    %155 = vmatpush1.xpose.msra.mxu0 0.0
    %156 = vmatprep.mubr.f32.mxu0 0.0
    %157 = vmatmul.mubr.f32.gmra.mrb[0].mxu0 %v87
    %v158 = vpop.f32.mrb[0].mxu0
    %v159 = vadd.f32 0.0, %v158
    %v160 = vpop.f32.mrb[0].mxu0
    %161 = vdwg.mxu0
    %v162 = vld [vmem:[#allocation3] sm:$0xff]
    %v163 = vmul.f32 %v159, 1.442695
    %v164 = vpow.pop %v163
    %vm165 = vcmask 64512
    %v166 = vsel %vm165, %v164, 0.0
    %167 = vadd.xlane.f32.xlu0 %v166
    %v168 = vpop.xlane.xlu0 %167
    %v169 = vadd.f32 %v162, %v168
    %vm170 = vcmask 7168
    %171 = vst.msk [vmem:[#allocation3] sm:$0xff] %vm170, %v169
    // Predicated region
    $region30: #{tpu_custom_call.1} parent=1 // pred_check
      %p172 = pneg %p49
    $region31: #{tpu_custom_call.1} parent=1 // pred_check_branch
      %174 = sbr.rel (%p172) target = $region33
    $region32: #{tpu_custom_call.1} parent=1 // pred_region
      %v175 = vld [vmem:[#allocation4] sm:$0xff]
      %v176 = vmul.f32 %v175, 1.442695
      %v177 = vpow.pop %v176
      %v178 = vld [vmem:[#allocation3] sm:$0xff]
      %v179 = vsub.f32 %v178, %v177
      %v180 = vlog2.pop %v179
      %v181 = vmul.f32 %v180, 0.6931472
      %v182 = vsub.f32 %v181, %v175
      %183 = vst.msk [vmem:[%s3] sm:$0xff] %vm170, %v182
    $region33: #{tpu_custom_call.1} parent=1 // pred_fallthru
      _
    // Predicated region
    $region34: #{tpu_custom_call.1} parent=1 // pred_check
      _
    $region35: #{tpu_custom_call.1} parent=1 // pred_check_branch
      %185 = sbr.rel (0) target = $region37
    $region36: #{tpu_custom_call.1} parent=1 // pred_region
      _
    $region37: #{tpu_custom_call.1} parent=1 // pred_fallthru
      _
    // Predicated region
    $region38: #{tpu_custom_call.1} parent=1 // pred_check
      _
    $region39: #{tpu_custom_call.1} parent=1 // pred_check_branch
      %187 = sbr.rel (0) target = $region41
    $region40: #{tpu_custom_call.1} parent=1 // pred_region
      _
    $region41: #{tpu_custom_call.1} parent=1 // pred_fallthru
      _
    %188 = vsyncpa [#allocation6], 1
    %189 = vsyncpa [#allocation8], 1

</llo_original>
